<compile_context>
chip_gen: v5e
topology: v5e:2x2
jax: 0.10.0
libtpu: 0.0.40
codegen_flags: <defaults>
</compile_context>

<pallas_src>
import functools

import jax
import jax.numpy as jnp
from jax import lax
from jax.experimental import pallas as pl
from jax.experimental.pallas import tpu as pltpu


# Grid-invariant operands (weights/biases): request single buffering so the
# constant index_map blocks are not double-buffered.  Guarded for older JAX
# without BlockSpec.pipeline_mode.
if hasattr(pl, "Buffered"):
    _RESIDENT = dict(pipeline_mode=pl.Buffered(1))
else:
    _RESIDENT = {}


def _mhsa_kernel(x_ref, wqkv_ref, bqkv_ref, wproj_ref, bproj_ref,
                 o_ref, qkv_ref, ctx_ref, *,
                 num_heads, head_dim, seq_len, batch_block, scale):
    """One block of `batch_block` batch elements per grid step.

    x_ref:     (rows, E)      VMEM  (compute dtype; rows = batch_block * S)
    wqkv_ref:  (E, 3E)        VMEM  (in x out, compute dtype, single-buffered)
    bqkv_ref:  (1, 3E)        VMEM  (f32)
    wproj_ref: (E, E)         VMEM  (in x out, compute dtype, single-buffered)
    bproj_ref: (1, E)         VMEM  (f32)
    o_ref:     (rows, E)      VMEM  (model dtype)
    qkv_ref:   (rows, 3E)     VMEM scratch (compute dtype)
    ctx_ref:   (rows, E)      VMEM scratch (compute dtype)
    """
    S = seq_len
    D = head_dim
    E = num_heads * head_dim

    # ---- (1) fused QKV projection: one MXU matmul with M = rows ----
    qkv = jnp.dot(x_ref[...], wqkv_ref[...],
                  preferred_element_type=jnp.float32) + bqkv_ref[...]
    qkv_ref[...] = qkv.astype(qkv_ref.dtype)

    # ---- (2) per-batch-element attention; each head writes its context ----
    # ---- into a lane-contiguous column block of ctx_ref               ----
    def attend(r0):
        for h in range(num_heads):             # static lane offsets (h * D)
            c = h * D
            q = qkv_ref[pl.ds(r0, S), pl.ds(0 * E + c, D)] * scale   # (S, D)
            k = qkv_ref[pl.ds(r0, S), pl.ds(1 * E + c, D)]           # (S, D)
            v = qkv_ref[pl.ds(r0, S), pl.ds(2 * E + c, D)]           # (S, D)

            # scores: q @ k^T via contraction on D (no materialized transpose)
            s = lax.dot_general(q, k, (((1,), (1,)), ((), ())),
                                preferred_element_type=jnp.float32)  # (S, S)

            # softmax with deferred (exact) normalization
            m = jnp.max(s, axis=-1, keepdims=True)                   # (S, 1)
            p = jnp.exp(s - m)                                       # (S, S)
            denom = jnp.sum(p, axis=-1, keepdims=True)               # (S, 1)

            ctx = jnp.dot(p.astype(v.dtype), v,
                          preferred_element_type=jnp.float32)        # (S, D)
            ctx = ctx * pl.reciprocal(denom, approx=False)

            ctx_ref[pl.ds(r0, S), pl.ds(c, D)] = ctx.astype(ctx_ref.dtype)

    if batch_block == 1:
        attend(0)                                # grid covers the batch axis
    else:
        sub_aligned = (S % 8 == 0)

        def body(bt, carry):
            r0 = bt * S
            if sub_aligned:
                r0 = pl.multiple_of(r0, 8)
            attend(r0)
            return carry

        lax.fori_loop(0, batch_block, body, 0)

    # ---- (3) single full-width output projection + bias, one dense store ----
    out = jnp.dot(ctx_ref[...], wproj_ref[...],
                  preferred_element_type=jnp.float32) + bproj_ref[...]
    o_ref[...] = out.astype(o_ref.dtype)


def _pick_batch_block(B, S, rows_cap=1024):
    """Largest divisor of B such that rows = batch_block*S fits rows_cap, partial
    blocks are sublane(8)-aligned, and (when B >= 2) the grid keeps >= 2 steps
    so the 'parallel' axis can shard across both v7x TensorCores."""
    candidates = []
    for c in range(1, B + 1):
        if B % c:
            continue
        if c != B and (c * S) % 8:
            continue                       # partial row blocks must be 8-aligned
        if c * S > rows_cap:
            continue
        if B >= 2 and B // c < 2:
            continue                       # leave work for the second TC (v7x)
        candidates.append(c)
    if candidates:
        return max(candidates)
    # Fallbacks: relax the megacore constraint, then the rows cap; never assert.
    aligned = [c for c in range(1, B + 1)
               if B % c == 0 and (c == B or (c * S) % 8 == 0)]
    small = [c for c in aligned if c * S <= rows_cap]
    if small:
        return max(small)
    return min(aligned)


def _vmem_limit_bytes(rows, E, compute_bytes, out_bytes):
    """Scoped VMEM budget derived from the actual buffers (not hardcoded)."""
    x_blk = rows * E * compute_bytes * 2            # input block, double-buffered
    out_blk = rows * E * out_bytes * 2              # output block, double-buffered
    weights = (3 * E * E + E * E) * compute_bytes   # single-buffered residents
    biases = (3 * E + E) * 4 * 8                    # f32, sublane-padded
    scratch = rows * (3 * E + E) * compute_bytes    # QKV + ctx slabs
    need = x_blk + out_blk + weights + biases + scratch
    # 1.5x headroom for compiler temporaries; cap well inside any generation's
    # physical VMEM (v7x: 64 MiB/TC, v5e/v6e: 128 MiB).
    return min(int(need * 1.5) + (4 << 20), 100 * 1024 * 1024)


def self_attention_encoder(x, w_qkv, b_qkv, w_proj, b_proj, *,
                           num_heads, batch_block=None, rows_cap=1024,
                           compute_dtype=None):
    """x: (B, S, E); weights in PyTorch nn.Linear layout (out, in).

    compute_dtype: dtype used for the matmul operands and the QKV/ctx scratch
      slabs (accumulation is always f32).  Pass jnp.bfloat16 for production
      RoBERTa shapes (native MXU input rate on v5e/v6e/v7x, half the DMA/VMEM).
    rows_cap: per-grid-step row budget; raise to ~2048 on v5e/v6e (128 MiB
      VMEM), keep <= 1024 on v7x (64 MiB/TC).
    """
    B, S, E = x.shape
    assert E % num_heads == 0
    head_dim = E // num_heads
    scale = float(head_dim) ** (-0.5)

    out_dtype = x.dtype
    compute_dtype = jnp.dtype(x.dtype if compute_dtype is None else compute_dtype)

    if batch_block is None:
        batch_block = _pick_batch_block(B, S, rows_cap=rows_cap)
    assert B % batch_block == 0
    rows = batch_block * S
    n_blocks = B // batch_block

    # Flat (B*S, E) slab: lane-dense input/output, no in-kernel batch reshapes.
    x2 = x.reshape(B * S, E).astype(compute_dtype)
    wqkv_t = w_qkv.T.astype(compute_dtype)               # (E, 3E)
    wproj_t = w_proj.T.astype(compute_dtype)             # (E, E)
    bqkv_2d = b_qkv.reshape(1, 3 * E).astype(jnp.float32)
    bproj_2d = b_proj.reshape(1, E).astype(jnp.float32)

    kernel = functools.partial(_mhsa_kernel,
                               num_heads=num_heads,
                               head_dim=head_dim,
                               seq_len=S,
                               batch_block=batch_block,
                               scale=scale)

    vmem_limit = _vmem_limit_bytes(rows, E, compute_dtype.itemsize,
                                   jnp.dtype(out_dtype).itemsize)

    out2 = pl.pallas_call(
        kernel,
        out_shape=jax.ShapeDtypeStruct((B * S, E), out_dtype),
        grid_spec=pltpu.PrefetchScalarGridSpec(
            num_scalar_prefetch=0,
            grid=(n_blocks,),
            in_specs=[
                pl.BlockSpec((rows, E), lambda i: (i, 0)),                 # x rows
                pl.BlockSpec((E, 3 * E), lambda i: (0, 0), **_RESIDENT),   # W_qkv^T
                pl.BlockSpec((1, 3 * E), lambda i: (0, 0), **_RESIDENT),   # b_qkv
                pl.BlockSpec((E, E), lambda i: (0, 0), **_RESIDENT),       # W_proj^T
                pl.BlockSpec((1, E), lambda i: (0, 0), **_RESIDENT),       # b_proj
            ],
            out_specs=pl.BlockSpec((rows, E), lambda i: (i, 0)),
            scratch_shapes=[
                pltpu.VMEM((rows, 3 * E), compute_dtype),   # QKV slab
                pltpu.VMEM((rows, E), compute_dtype),       # per-head context slab
            ],
        ),
        compiler_params=pltpu.CompilerParams(
            dimension_semantics=("parallel",),
            vmem_limit_bytes=vmem_limit,
        ),
    )(x2, wqkv_t, bqkv_2d, wproj_t, bproj_2d)

    return out2.reshape(B, S, E)


def _reference_forward(x, w_qkv, b_qkv, w_proj, b_proj, num_heads):
    """Plain-JAX mirror of the PyTorch forward (attention_mask=None)."""
    B, S, E = x.shape
    D = E // num_heads
    scale = D ** (-0.5)
    qkv = x @ w_qkv.T + b_qkv                                   # (B,S,3E)
    qkv = qkv.reshape(B, S, 3, num_heads, D).transpose(2, 0, 3, 1, 4)
    q, k, v = qkv[0], qkv[1], qkv[2]                            # (B,H,S,D)
    attn = jnp.einsum('bhqd,bhkd->bhqk', q, k) * scale
    attn = jax.nn.softmax(attn, axis=-1)
    ctx = jnp.einsum('bhqk,bhkd->bhqd', attn, v)                # (B,H,S,D)
    ctx = ctx.transpose(0, 2, 1, 3).reshape(B, S, E)
    return ctx @ w_proj.T + b_proj


if __name__ == "__main__":
    # Small shapes consistent with the module: embed_dim divisible by num_heads.
    batch, seq_len, embed_dim, num_heads = 2, 16, 64, 4

    key = jax.random.PRNGKey(0)
    kx, kw1, kb1, kw2, kb2 = jax.random.split(key, 5)

    x = jax.random.normal(kx, (batch, seq_len, embed_dim), dtype=jnp.float32)
    # nn.Linear(embed_dim, 3*embed_dim): weight (3E, E), bias (3E,)
    w_qkv = 0.02 * jax.random.normal(kw1, (3 * embed_dim, embed_dim), dtype=jnp.float32)
    b_qkv = 0.02 * jax.random.normal(kb1, (3 * embed_dim,), dtype=jnp.float32)
    # nn.Linear(embed_dim, embed_dim): weight (E, E), bias (E,)
    w_proj = 0.02 * jax.random.normal(kw2, (embed_dim, embed_dim), dtype=jnp.float32)
    b_proj = 0.02 * jax.random.normal(kb2, (embed_dim,), dtype=jnp.float32)

    ref = _reference_forward(x, w_qkv, b_qkv, w_proj, b_proj, num_heads)

    # f32 path: strict check against the PyTorch-equivalent reference.
    out = self_attention_encoder(x, w_qkv, b_qkv, w_proj, b_proj,
                                 num_heads=num_heads)
    out = jax.block_until_ready(out)
    assert out.shape == (batch, seq_len, embed_dim)
    assert jnp.allclose(out, ref, atol=1e-3, rtol=1e-3), (
        f"f32 max abs err = {jnp.max(jnp.abs(out - ref))}")

    # bf16 mixed-precision path (production setting for RoBERTa shapes).
    out_bf16 = self_attention_encoder(x, w_qkv, b_qkv, w_proj, b_proj,
                                      num_heads=num_heads,
                                      compute_dtype=jnp.bfloat16)
    out_bf16 = jax.block_until_ready(out_bf16)
    assert jnp.allclose(out_bf16, ref, atol=2e-2, rtol=2e-2), (
        f"bf16 max abs err = {jnp.max(jnp.abs(out_bf16 - ref))}")

    print("KERNEL_OK")
</pallas_src>

<mosaic_0001>
module attributes {stable_mosaic.version = 11 : i64} {
  func.func @_mhsa_kernel(%arg0: i32, %arg1: memref<16x64xf32, #tpu.memory_space<vmem>>, %arg2: memref<64x192xf32, #tpu.memory_space<vmem>>, %arg3: memref<1x192xf32, #tpu.memory_space<vmem>>, %arg4: memref<64x64xf32, #tpu.memory_space<vmem>>, %arg5: memref<1x64xf32, #tpu.memory_space<vmem>>, %arg6: memref<16x64xf32, #tpu.memory_space<vmem>>, %arg7: memref<16x192xf32, #tpu.memory_space<vmem>>, %arg8: memref<16x64xf32, #tpu.memory_space<vmem>>) attributes {dimension_semantics = [#tpu.dimension_semantics<parallel>], iteration_bounds = array<i64: 2>, scalar_prefetch = 0 : i64, scratch_operands = 2 : i64, tpu.core_type = #tpu.core_type<tc>, window_params = [{transform_indices = @transform_0, window_bounds = array<i64: 16, 64>}, {pipeline_mode = #tpu.pipeline_mode<synchronous>, transform_indices = @transform_1, window_bounds = array<i64: 64, 192>}, {pipeline_mode = #tpu.pipeline_mode<synchronous>, transform_indices = @transform_2, window_bounds = array<i64: 1, 192>}, {pipeline_mode = #tpu.pipeline_mode<synchronous>, transform_indices = @transform_3, window_bounds = array<i64: 64, 64>}, {pipeline_mode = #tpu.pipeline_mode<synchronous>, transform_indices = @transform_4, window_bounds = array<i64: 1, 64>}, {transform_indices = @transform_5, window_bounds = array<i64: 16, 64>}]} {
    %c0 = arith.constant 0 : index
    %c0_0 = arith.constant 0 : index
    %0 = vector.load %arg1[%c0, %c0_0] : memref<16x64xf32, #tpu.memory_space<vmem>>, vector<16x64xf32>
    %c0_1 = arith.constant 0 : index
    %c0_2 = arith.constant 0 : index
    %1 = vector.load %arg2[%c0_1, %c0_2] : memref<64x192xf32, #tpu.memory_space<vmem>>, vector<64x192xf32>
    %cst = arith.constant dense<0.000000e+00> : vector<16x192xf32>
    %2 = tpu.matmul %0, %1, %cst {dimension_numbers = #tpu.dot_dimension_numbers<[1], [0], [0], [1], [0, 0, 1, 1], [], []>} : vector<16x64xf32>, vector<64x192xf32>, vector<16x192xf32> -> vector<16x192xf32>
    %c0_3 = arith.constant 0 : index
    %c0_4 = arith.constant 0 : index
    %3 = vector.load %arg3[%c0_3, %c0_4] : memref<1x192xf32, #tpu.memory_space<vmem>>, vector<1x192xf32>
    %4 = vector.broadcast %3 : vector<1x192xf32> to vector<16x192xf32>
    %5 = arith.addf %2, %4 : vector<16x192xf32>
    %c0_5 = arith.constant 0 : index
    %c0_6 = arith.constant 0 : index
    %6 = vector.load %arg7[%c0_5, %c0_6] : memref<16x192xf32, #tpu.memory_space<vmem>>, vector<16x192xf32>
    tpu.vector_store %arg7[%c0_5, %c0_6], %5 {strides = array<i32>} : memref<16x192xf32, #tpu.memory_space<vmem>>, vector<16x192xf32>,
    %c0_7 = arith.constant 0 : index
    %c0_8 = arith.constant 0 : index
    %7 = vector.load %arg7[%c0_7, %c0_8] : memref<16x192xf32, #tpu.memory_space<vmem>>, vector<16x16xf32>
    %cst_9 = arith.constant 2.500000e-01 : f32
    %8 = vector.broadcast %cst_9 : f32 to vector<16x16xf32>
    %9 = arith.mulf %7, %8 : vector<16x16xf32>
    %c0_10 = arith.constant 0 : index
    %c64 = arith.constant 64 : index
    %10 = vector.load %arg7[%c0_10, %c64] : memref<16x192xf32, #tpu.memory_space<vmem>>, vector<16x16xf32>
    %c0_11 = arith.constant 0 : index
    %c128 = arith.constant 128 : index
    %11 = vector.load %arg7[%c0_11, %c128] : memref<16x192xf32, #tpu.memory_space<vmem>>, vector<16x16xf32>
    %cst_12 = arith.constant dense<0.000000e+00> : vector<16x16xf32>
    %12 = tpu.matmul %9, %10, %cst_12 {dimension_numbers = #tpu.dot_dimension_numbers<[1], [1], [0], [0], [0, 0, 1, 0], [], []>} : vector<16x16xf32>, vector<16x16xf32>, vector<16x16xf32> -> vector<16x16xf32>
    %cst_13 = arith.constant dense<0xFF800000> : vector<16xf32>
    %13 = vector.multi_reduction <maximumf>, %12, %cst_13 [1] : vector<16x16xf32> to vector<16xf32>
    %14 = vector.shape_cast %13 : vector<16xf32> to vector<16x1xf32>
    %15 = vector.broadcast %14 : vector<16x1xf32> to vector<16x16xf32>
    %16 = arith.subf %12, %15 : vector<16x16xf32>
    %17 = math.exp %16 : vector<16x16xf32>
    %cst_14 = arith.constant dense<0.000000e+00> : vector<16xf32>
    %18 = vector.multi_reduction <add>, %17, %cst_14 [1] : vector<16x16xf32> to vector<16xf32>
    %19 = vector.shape_cast %18 : vector<16xf32> to vector<16x1xf32>
    %cst_15 = arith.constant dense<0.000000e+00> : vector<16x16xf32>
    %20 = tpu.matmul %17, %11, %cst_15 {dimension_numbers = #tpu.dot_dimension_numbers<[1], [0], [0], [1], [0, 0, 1, 1], [], []>} : vector<16x16xf32>, vector<16x16xf32>, vector<16x16xf32> -> vector<16x16xf32>
    %21 = tpu.reciprocal %19 : vector<16x1xf32> -> vector<16x1xf32>
    %22 = vector.broadcast %21 : vector<16x1xf32> to vector<16x16xf32>
    %23 = arith.mulf %20, %22 : vector<16x16xf32>
    %c0_16 = arith.constant 0 : index
    %c0_17 = arith.constant 0 : index
    %24 = vector.load %arg8[%c0_16, %c0_17] : memref<16x64xf32, #tpu.memory_space<vmem>>, vector<16x16xf32>
    tpu.vector_store %arg8[%c0_16, %c0_17], %23 {strides = array<i32>} : memref<16x64xf32, #tpu.memory_space<vmem>>, vector<16x16xf32>,
    %c0_18 = arith.constant 0 : index
    %c16 = arith.constant 16 : index
    %25 = vector.load %arg7[%c0_18, %c16] : memref<16x192xf32, #tpu.memory_space<vmem>>, vector<16x16xf32>
    %cst_19 = arith.constant 2.500000e-01 : f32
    %26 = vector.broadcast %cst_19 : f32 to vector<16x16xf32>
    %27 = arith.mulf %25, %26 : vector<16x16xf32>
    %c0_20 = arith.constant 0 : index
    %c80 = arith.constant 80 : index
    %28 = vector.load %arg7[%c0_20, %c80] : memref<16x192xf32, #tpu.memory_space<vmem>>, vector<16x16xf32>
    %c0_21 = arith.constant 0 : index
    %c144 = arith.constant 144 : index
    %29 = vector.load %arg7[%c0_21, %c144] : memref<16x192xf32, #tpu.memory_space<vmem>>, vector<16x16xf32>
    %cst_22 = arith.constant dense<0.000000e+00> : vector<16x16xf32>
    %30 = tpu.matmul %27, %28, %cst_22 {dimension_numbers = #tpu.dot_dimension_numbers<[1], [1], [0], [0], [0, 0, 1, 0], [], []>} : vector<16x16xf32>, vector<16x16xf32>, vector<16x16xf32> -> vector<16x16xf32>
    %cst_23 = arith.constant dense<0xFF800000> : vector<16xf32>
    %31 = vector.multi_reduction <maximumf>, %30, %cst_23 [1] : vector<16x16xf32> to vector<16xf32>
    %32 = vector.shape_cast %31 : vector<16xf32> to vector<16x1xf32>
    %33 = vector.broadcast %32 : vector<16x1xf32> to vector<16x16xf32>
    %34 = arith.subf %30, %33 : vector<16x16xf32>
    %35 = math.exp %34 : vector<16x16xf32>
    %cst_24 = arith.constant dense<0.000000e+00> : vector<16xf32>
    %36 = vector.multi_reduction <add>, %35, %cst_24 [1] : vector<16x16xf32> to vector<16xf32>
    %37 = vector.shape_cast %36 : vector<16xf32> to vector<16x1xf32>
    %cst_25 = arith.constant dense<0.000000e+00> : vector<16x16xf32>
    %38 = tpu.matmul %35, %29, %cst_25 {dimension_numbers = #tpu.dot_dimension_numbers<[1], [0], [0], [1], [0, 0, 1, 1], [], []>} : vector<16x16xf32>, vector<16x16xf32>, vector<16x16xf32> -> vector<16x16xf32>
    %39 = tpu.reciprocal %37 : vector<16x1xf32> -> vector<16x1xf32>
    %40 = vector.broadcast %39 : vector<16x1xf32> to vector<16x16xf32>
    %41 = arith.mulf %38, %40 : vector<16x16xf32>
    %c0_26 = arith.constant 0 : index
    %c16_27 = arith.constant 16 : index
    %42 = vector.load %arg8[%c0_26, %c16_27] : memref<16x64xf32, #tpu.memory_space<vmem>>, vector<16x16xf32>
    tpu.vector_store %arg8[%c0_26, %c16_27], %41 {strides = array<i32>} : memref<16x64xf32, #tpu.memory_space<vmem>>, vector<16x16xf32>,
    %c0_28 = arith.constant 0 : index
    %c32 = arith.constant 32 : index
    %43 = vector.load %arg7[%c0_28, %c32] : memref<16x192xf32, #tpu.memory_space<vmem>>, vector<16x16xf32>
    %cst_29 = arith.constant 2.500000e-01 : f32
    %44 = vector.broadcast %cst_29 : f32 to vector<16x16xf32>
    %45 = arith.mulf %43, %44 : vector<16x16xf32>
    %c0_30 = arith.constant 0 : index
    %c96 = arith.constant 96 : index
    %46 = vector.load %arg7[%c0_30, %c96] : memref<16x192xf32, #tpu.memory_space<vmem>>, vector<16x16xf32>
    %c0_31 = arith.constant 0 : index
    %c160 = arith.constant 160 : index
    %47 = vector.load %arg7[%c0_31, %c160] : memref<16x192xf32, #tpu.memory_space<vmem>>, vector<16x16xf32>
    %cst_32 = arith.constant dense<0.000000e+00> : vector<16x16xf32>
    %48 = tpu.matmul %45, %46, %cst_32 {dimension_numbers = #tpu.dot_dimension_numbers<[1], [1], [0], [0], [0, 0, 1, 0], [], []>} : vector<16x16xf32>, vector<16x16xf32>, vector<16x16xf32> -> vector<16x16xf32>
    %cst_33 = arith.constant dense<0xFF800000> : vector<16xf32>
    %49 = vector.multi_reduction <maximumf>, %48, %cst_33 [1] : vector<16x16xf32> to vector<16xf32>
    %50 = vector.shape_cast %49 : vector<16xf32> to vector<16x1xf32>
    %51 = vector.broadcast %50 : vector<16x1xf32> to vector<16x16xf32>
    %52 = arith.subf %48, %51 : vector<16x16xf32>
    %53 = math.exp %52 : vector<16x16xf32>
    %cst_34 = arith.constant dense<0.000000e+00> : vector<16xf32>
    %54 = vector.multi_reduction <add>, %53, %cst_34 [1] : vector<16x16xf32> to vector<16xf32>
    %55 = vector.shape_cast %54 : vector<16xf32> to vector<16x1xf32>
    %cst_35 = arith.constant dense<0.000000e+00> : vector<16x16xf32>
    %56 = tpu.matmul %53, %47, %cst_35 {dimension_numbers = #tpu.dot_dimension_numbers<[1], [0], [0], [1], [0, 0, 1, 1], [], []>} : vector<16x16xf32>, vector<16x16xf32>, vector<16x16xf32> -> vector<16x16xf32>
    %57 = tpu.reciprocal %55 : vector<16x1xf32> -> vector<16x1xf32>
    %58 = vector.broadcast %57 : vector<16x1xf32> to vector<16x16xf32>
    %59 = arith.mulf %56, %58 : vector<16x16xf32>
    %c0_36 = arith.constant 0 : index
    %c32_37 = arith.constant 32 : index
    %60 = vector.load %arg8[%c0_36, %c32_37] : memref<16x64xf32, #tpu.memory_space<vmem>>, vector<16x16xf32>
    tpu.vector_store %arg8[%c0_36, %c32_37], %59 {strides = array<i32>} : memref<16x64xf32, #tpu.memory_space<vmem>>, vector<16x16xf32>,
    %c0_38 = arith.constant 0 : index
    %c48 = arith.constant 48 : index
    %61 = vector.load %arg7[%c0_38, %c48] : memref<16x192xf32, #tpu.memory_space<vmem>>, vector<16x16xf32>
    %cst_39 = arith.constant 2.500000e-01 : f32
    %62 = vector.broadcast %cst_39 : f32 to vector<16x16xf32>
    %63 = arith.mulf %61, %62 : vector<16x16xf32>
    %c0_40 = arith.constant 0 : index
    %c112 = arith.constant 112 : index
    %64 = vector.load %arg7[%c0_40, %c112] : memref<16x192xf32, #tpu.memory_space<vmem>>, vector<16x16xf32>
    %c0_41 = arith.constant 0 : index
    %c176 = arith.constant 176 : index
    %65 = vector.load %arg7[%c0_41, %c176] : memref<16x192xf32, #tpu.memory_space<vmem>>, vector<16x16xf32>
    %cst_42 = arith.constant dense<0.000000e+00> : vector<16x16xf32>
    %66 = tpu.matmul %63, %64, %cst_42 {dimension_numbers = #tpu.dot_dimension_numbers<[1], [1], [0], [0], [0, 0, 1, 0], [], []>} : vector<16x16xf32>, vector<16x16xf32>, vector<16x16xf32> -> vector<16x16xf32>
    %cst_43 = arith.constant dense<0xFF800000> : vector<16xf32>
    %67 = vector.multi_reduction <maximumf>, %66, %cst_43 [1] : vector<16x16xf32> to vector<16xf32>
    %68 = vector.shape_cast %67 : vector<16xf32> to vector<16x1xf32>
    %69 = vector.broadcast %68 : vector<16x1xf32> to vector<16x16xf32>
    %70 = arith.subf %66, %69 : vector<16x16xf32>
    %71 = math.exp %70 : vector<16x16xf32>
    %cst_44 = arith.constant dense<0.000000e+00> : vector<16xf32>
    %72 = vector.multi_reduction <add>, %71, %cst_44 [1] : vector<16x16xf32> to vector<16xf32>
    %73 = vector.shape_cast %72 : vector<16xf32> to vector<16x1xf32>
    %cst_45 = arith.constant dense<0.000000e+00> : vector<16x16xf32>
    %74 = tpu.matmul %71, %65, %cst_45 {dimension_numbers = #tpu.dot_dimension_numbers<[1], [0], [0], [1], [0, 0, 1, 1], [], []>} : vector<16x16xf32>, vector<16x16xf32>, vector<16x16xf32> -> vector<16x16xf32>
    %75 = tpu.reciprocal %73 : vector<16x1xf32> -> vector<16x1xf32>
    %76 = vector.broadcast %75 : vector<16x1xf32> to vector<16x16xf32>
    %77 = arith.mulf %74, %76 : vector<16x16xf32>
    %c0_46 = arith.constant 0 : index
    %c48_47 = arith.constant 48 : index
    %78 = vector.load %arg8[%c0_46, %c48_47] : memref<16x64xf32, #tpu.memory_space<vmem>>, vector<16x16xf32>
    tpu.vector_store %arg8[%c0_46, %c48_47], %77 {strides = array<i32>} : memref<16x64xf32, #tpu.memory_space<vmem>>, vector<16x16xf32>,
    %c0_48 = arith.constant 0 : index
    %c0_49 = arith.constant 0 : index
    %79 = vector.load %arg8[%c0_48, %c0_49] : memref<16x64xf32, #tpu.memory_space<vmem>>, vector<16x64xf32>
    %c0_50 = arith.constant 0 : index
    %c0_51 = arith.constant 0 : index
    %80 = vector.load %arg4[%c0_50, %c0_51] : memref<64x64xf32, #tpu.memory_space<vmem>>, vector<64x64xf32>
    %cst_52 = arith.constant dense<0.000000e+00> : vector<16x64xf32>
    %81 = tpu.matmul %79, %80, %cst_52 {dimension_numbers = #tpu.dot_dimension_numbers<[1], [0], [0], [1], [0, 0, 1, 1], [], []>} : vector<16x64xf32>, vector<64x64xf32>, vector<16x64xf32> -> vector<16x64xf32>
    %c0_53 = arith.constant 0 : index
    %c0_54 = arith.constant 0 : index
    %82 = vector.load %arg5[%c0_53, %c0_54] : memref<1x64xf32, #tpu.memory_space<vmem>>, vector<1x64xf32>
    %83 = vector.broadcast %82 : vector<1x64xf32> to vector<16x64xf32>
    %84 = arith.addf %81, %83 : vector<16x64xf32>
    %c0_55 = arith.constant 0 : index
    %c0_56 = arith.constant 0 : index
    %85 = vector.load %arg6[%c0_55, %c0_56] : memref<16x64xf32, #tpu.memory_space<vmem>>, vector<16x64xf32>
    tpu.vector_store %arg6[%c0_55, %c0_56], %84 {strides = array<i32>} : memref<16x64xf32, #tpu.memory_space<vmem>>, vector<16x64xf32>,
    return
  }
  func.func @transform_0(%arg0: i32) -> (i32, i32) {
    %c0_i32 = arith.constant 0 : i32
    %c0_i32_0 = arith.constant 0 : i32
    return %arg0, %c0_i32 : i32, i32
  }
  func.func @transform_1(%arg0: i32) -> (i32, i32) {
    %c0_i32 = arith.constant 0 : i32
    %c0_i32_0 = arith.constant 0 : i32
    %c0_i32_1 = arith.constant 0 : i32
    return %c0_i32, %c0_i32_0 : i32, i32
  }
  func.func @transform_2(%arg0: i32) -> (i32, i32) {
    %c0_i32 = arith.constant 0 : i32
    %c0_i32_0 = arith.constant 0 : i32
    %c0_i32_1 = arith.constant 0 : i32
    return %c0_i32, %c0_i32_0 : i32, i32
  }
  func.func @transform_3(%arg0: i32) -> (i32, i32) {
    %c0_i32 = arith.constant 0 : i32
    %c0_i32_0 = arith.constant 0 : i32
    %c0_i32_1 = arith.constant 0 : i32
    return %c0_i32, %c0_i32_0 : i32, i32
  }
  func.func @transform_4(%arg0: i32) -> (i32, i32) {
    %c0_i32 = arith.constant 0 : i32
    %c0_i32_0 = arith.constant 0 : i32
    %c0_i32_1 = arith.constant 0 : i32
    return %c0_i32, %c0_i32_0 : i32, i32
  }
  func.func @transform_5(%arg0: i32) -> (i32, i32) {
    %c0_i32 = arith.constant 0 : i32
    %c0_i32_0 = arith.constant 0 : i32
    return %arg0, %c0_i32 : i32, i32
  }
}

</mosaic_0001>

<llo_original>
// kernel: tpu_custom_call.1
$region0: #{tpu_custom_call.1}
  #allocation0 [shape = 'u32[]', space=smem, size = 0x4, offset = 0x4, fixed_abs, tag = 'smem constant byte address 0x4 - core index']
  #allocation1 [shape = 'u32[72,128]{1,0:T(1,128)}', space=vmem, size = 0x9000, scoped, tag = 'internal scratch']
  #allocation2 [shape = 'f32[16,192]{1,0:T(8,128)}', space=vmem, size = 0x4000, scoped, tag = 'scratch operand']
  #allocation3 [shape = 'f32[16,64]{1,0:T(8,128)}', space=vmem, size = 0x2000, scoped, tag = 'scratch operand']
  %s0 = inlined_call_operand.hbm [shape: f32[32,64], index: 0, kind: input, shape index: {}]
  %s1 = inlined_call_operand.hbm [shape: f32[64,192], index: 1, kind: input, shape index: {}]
  %s2 = inlined_call_operand.hbm [shape: f32[1,192], index: 2, kind: input, shape index: {}]
  %s3 = inlined_call_operand.hbm [shape: f32[64,64], index: 3, kind: input, shape index: {}]
  %s4 = inlined_call_operand.vmem [shape: f32[1,64], index: 4, kind: input, shape index: {}]
  %s5 = inlined_call_operand.hbm [shape: f32[32,64], index: 5, kind: output, shape index: {}]
  %s6 = sld [smem:[#allocation0]]
  $region69: #{tpu_custom_call.1} parent=0
    _
  %s8 = ssub.s32 1, %s6
  %s9 = scalar_select 0, %s8, %s6
  $region1: #{tpu_custom_call.1} parent=0
    #allocation4 [shape = 'u8[16384]{0}', space=vmem, size = 0x4000, scoped, tag = 'input window, operand 0']
    #allocation5 [shape = 's32[2]{0}', space=sflag, size = 0x8, scoped, tag = 'scoped memory for tpu_custom_call.1']
    #allocation6 [shape = 's32[2]{0}', space=sflag, size = 0x8, scoped, tag = 'scoped memory for tpu_custom_call.1']
    #allocation7 [shape = 'u8[65536]{0}', space=vmem, size = 0x10000, scoped, tag = 'input window, operand 1, single buffered']
    #allocation8 [shape = 's32[1]{0}', space=sflag, size = 0x4, scoped, tag = 'scoped memory for tpu_custom_call.1']
    #allocation9 [shape = 'u8[1024]{0}', space=vmem, size = 0x400, scoped, tag = 'input window, operand 2, single buffered']
    #allocation10 [shape = 'u8[32768]{0}', space=vmem, size = 0x8000, scoped, tag = 'input window, operand 3, single buffered']
    #allocation11 [shape = 's32[1]{0}', space=sflag, size = 0x4, scoped, tag = 'scoped memory for tpu_custom_call.1']
    #allocation12 [shape = 'u8[16384]{0}', space=vmem, size = 0x4000, scoped, tag = 'output window, operand 0']
    %10 = vsyncpa [#allocation5], 0
    %s11 = scalar_lea.sflag [#allocation5], 1
    %12 = vsyncpa %s11, 0
    %13 = vsyncpa [#allocation8], 0
    %14 = vsyncpa [#allocation11], 0
    %15 = vsyncpa [#allocation6], 0
    %s16 = scalar_lea.sflag [#allocation6], 1
    %17 = vsyncpa %s16, 0
    loop: start=0, step=1, limit=4
    $region2: #{tpu_custom_call.1} parent=1 // loop_pre_header
      _
    $region3: #{tpu_custom_call.1} parent=1 // loop_header
      %s19 = sphi 0, %s23
      %p20 = scmp.ge.s32.totalorder %s19, 4
      %s29 = sphi 0, %s31
      %s32 = sphi 0, %s29
      %s33 = sphi 0, %s32
      %s49 = sphi 0, %s33
      %s53 = sphi 0, %s53
      %s55 = sphi 0, %s53
      %s56 = sphi 0, %s55
      %s70 = sphi 0, %s56
      %s74 = sphi 0, %s74
      %s76 = sphi 0, %s74
      %s77 = sphi 0, %s76
      %s91 = sphi 0, %s77
      %s95 = sphi 0, %s95
      %s97 = sphi 0, %s95
      %s98 = sphi 0, %s97
      %s112 = sphi 0, %s98
      %s116 = sphi 0, %s116
      %s118 = sphi 0, %s116
      %s119 = sphi 0, %s118
      %s133 = sphi 0, %s119
      %s139 = sphi 0, %s141
      %s142 = sphi 0, %s139
      %s143 = sphi 0, %s142
      %s159 = sphi 0, %s143
    $region4: #{tpu_custom_call.1} parent=1 // loop_header_branch
      %22 = sbr.rel (%p20) target = $region8
    $region5: #{tpu_custom_call.1} parent=1 // loop_body
      %s24 = ssub.s32 %s19, 1
      %s25 = ssub.s32 %s19, 2
      %s26 = sadd.s32 %s19, 1
      %s27 = ssub.s32 %s19, %s26
      %p28 = scmp.eq.s32.totalorder %s27, 0
      %s30 = sadd.s32 %s29, 1
      %s31 = scalar_select %p28, %s29, %s30
      %p34 = pneg %p28
      %p35 = scmp.eq.s32.totalorder %s19, 1
      %p36 = por %p34, %p35
      %p37 = scmp.ne.s32.totalorder %s29, %s32
      %p38 = scmp.eq.s32.totalorder %s19, 0
      %p39 = por %p37, %p38
      %p40 = scmp.ne.s32.totalorder %s29, %s32
      %p41 = scmp.eq.s32.totalorder %s24, 1
      %p42 = por %p40, %p41
      %p43 = scmp.ne.s32.totalorder %s32, %s33
      %p44 = scmp.eq.s32.totalorder %s24, 0
      %p45 = por %p43, %p44
      %p46 = scmp.ne.s32.totalorder %s32, %s33
      %p47 = scmp.eq.s32.totalorder %s25, 1
      %p48 = por %p46, %p47
      %p50 = scmp.ne.s32.totalorder %s33, %s49
      %p51 = scmp.eq.s32.totalorder %s25, 0
      %p52 = por %p50, %p51
      %s54 = sadd.s32 %s53, 1
      %p57 = scmp.eq.s32.totalorder %s19, 1
      %p58 = scmp.ne.s32.totalorder %s53, %s55
      %p59 = scmp.eq.s32.totalorder %s19, 0
      %p60 = por %p58, %p59
      %p61 = scmp.ne.s32.totalorder %s53, %s55
      %p62 = scmp.eq.s32.totalorder %s24, 1
      %p63 = por %p61, %p62
      %p64 = scmp.ne.s32.totalorder %s55, %s56
      %p65 = scmp.eq.s32.totalorder %s24, 0
      %p66 = por %p64, %p65
      %p67 = scmp.ne.s32.totalorder %s55, %s56
      %p68 = scmp.eq.s32.totalorder %s25, 1
      %p69 = por %p67, %p68
      %p71 = scmp.ne.s32.totalorder %s56, %s70
      %p72 = scmp.eq.s32.totalorder %s25, 0
      %p73 = por %p71, %p72
      %s75 = sadd.s32 %s74, 1
      %p78 = scmp.eq.s32.totalorder %s19, 1
      %p79 = scmp.ne.s32.totalorder %s74, %s76
      %p80 = scmp.eq.s32.totalorder %s19, 0
      %p81 = por %p79, %p80
      %p82 = scmp.ne.s32.totalorder %s74, %s76
      %p83 = scmp.eq.s32.totalorder %s24, 1
      %p84 = por %p82, %p83
      %p85 = scmp.ne.s32.totalorder %s76, %s77
      %p86 = scmp.eq.s32.totalorder %s24, 0
      %p87 = por %p85, %p86
      %p88 = scmp.ne.s32.totalorder %s76, %s77
      %p89 = scmp.eq.s32.totalorder %s25, 1
      %p90 = por %p88, %p89
      %p92 = scmp.ne.s32.totalorder %s77, %s91
      %p93 = scmp.eq.s32.totalorder %s25, 0
      %p94 = por %p92, %p93
      %s96 = sadd.s32 %s95, 1
      %p99 = scmp.eq.s32.totalorder %s19, 1
      %p100 = scmp.ne.s32.totalorder %s95, %s97
      %p101 = scmp.eq.s32.totalorder %s19, 0
      %p102 = por %p100, %p101
      %p103 = scmp.ne.s32.totalorder %s95, %s97
      %p104 = scmp.eq.s32.totalorder %s24, 1
      %p105 = por %p103, %p104
      %p106 = scmp.ne.s32.totalorder %s97, %s98
      %p107 = scmp.eq.s32.totalorder %s24, 0
      %p108 = por %p106, %p107
      %p109 = scmp.ne.s32.totalorder %s97, %s98
      %p110 = scmp.eq.s32.totalorder %s25, 1
      %p111 = por %p109, %p110
      %p113 = scmp.ne.s32.totalorder %s98, %s112
      %p114 = scmp.eq.s32.totalorder %s25, 0
      %p115 = por %p113, %p114
      %s117 = sadd.s32 %s116, 1
      %p120 = scmp.eq.s32.totalorder %s19, 1
      %p121 = scmp.ne.s32.totalorder %s116, %s118
      %p122 = scmp.eq.s32.totalorder %s19, 0
      %p123 = por %p121, %p122
      %p124 = scmp.ne.s32.totalorder %s116, %s118
      %p125 = scmp.eq.s32.totalorder %s24, 1
      %p126 = por %p124, %p125
      %p127 = scmp.ne.s32.totalorder %s118, %s119
      %p128 = scmp.eq.s32.totalorder %s24, 0
      %p129 = por %p127, %p128
      %p130 = scmp.ne.s32.totalorder %s118, %s119
      %p131 = scmp.eq.s32.totalorder %s25, 1
      %p132 = por %p130, %p131
      %p134 = scmp.ne.s32.totalorder %s119, %s133
      %p135 = scmp.eq.s32.totalorder %s25, 0
      %p136 = por %p134, %p135
      %s137 = ssub.s32 %s19, %s26
      %p138 = scmp.eq.s32.totalorder %s137, 0
      %s140 = sadd.s32 %s139, 1
      %s141 = scalar_select %p138, %s139, %s140
      %p144 = pneg %p138
      %p145 = scmp.eq.s32.totalorder %s19, 1
      %p146 = por %p144, %p145
      %p147 = scmp.ne.s32.totalorder %s139, %s142
      %p148 = scmp.eq.s32.totalorder %s19, 0
      %p149 = por %p147, %p148
      %p150 = scmp.ne.s32.totalorder %s139, %s142
      %p151 = scmp.eq.s32.totalorder %s24, 1
      %p152 = por %p150, %p151
      %p153 = scmp.ne.s32.totalorder %s142, %s143
      %p154 = scmp.eq.s32.totalorder %s24, 0
      %p155 = por %p153, %p154
      %p156 = scmp.ne.s32.totalorder %s142, %s143
      %p157 = scmp.eq.s32.totalorder %s25, 1
      %p158 = por %p156, %p157
      %p160 = scmp.ne.s32.totalorder %s143, %s159
      %p161 = scmp.eq.s32.totalorder %s25, 0
      %p162 = por %p160, %p161
      %p163 = scmp.le.s32.totalorder 1, %s19
      %p164 = scmp.lt.s32.totalorder %s19, 3
      %p165 = pnand %p163, %p164
      %p166 = pneg %p165
      // Predicated region
      $region9: #{tpu_custom_call.1} parent=5 // pred_check
        _
      $region10: #{tpu_custom_call.1} parent=5 // pred_check_branch
        %168 = sbr.rel (%p165) target = $region12
      $region11: #{tpu_custom_call.1} parent=5 // pred_region
        %s169 = ssub.s32 %s19, 1
        // Predicated region
        $region13: #{tpu_custom_call.1} parent=11 // pred_check
          %p170 = pneg %p66
        $region14: #{tpu_custom_call.1} parent=11 // pred_check_branch
          %172 = sbr.rel (%p170) target = $region16
        $region15: #{tpu_custom_call.1} parent=11 // pred_region
          %174 = vsyncadd [#allocation8], 0
          %s175 = sshll.u32 %s1, 4
          %s176 = int_to_ptr.hbm [resolvable:$true] %s175
          %s177 = sshll.u32 [#allocation7], 4
          %s178 = int_to_ptr.vmem [resolvable:$true] %s177
          %183 = dma.hbm_to_vmem [thread:$0]  %s176, 2048, %s178, [#allocation8], 256, 256, 16
        $region16: #{tpu_custom_call.1} parent=11 // pred_fallthru
          _
        // Predicated region
        $region17: #{tpu_custom_call.1} parent=11 // pred_check
          %p184 = pneg %p87
        $region18: #{tpu_custom_call.1} parent=11 // pred_check_branch
          %186 = sbr.rel (%p184) target = $region20
        $region19: #{tpu_custom_call.1} parent=11 // pred_region
          %188 = vsyncadd [#allocation8], 0
          %s190 = sshll.u32 %s2, 4
          %s191 = int_to_ptr.hbm [resolvable:$true] %s190
          %s192 = sshll.u32 [#allocation9], 4
          %s193 = int_to_ptr.vmem [resolvable:$true] %s192
          %195 = dma.hbm_to_vmem [thread:$0]  %s191, 32, %s193, [#allocation8]
        $region20: #{tpu_custom_call.1} parent=11 // pred_fallthru
          _
        // Predicated region
        $region21: #{tpu_custom_call.1} parent=11 // pred_check
          %p196 = pneg %p108
        $region22: #{tpu_custom_call.1} parent=11 // pred_check_branch
          %198 = sbr.rel (%p196) target = $region24
        $region23: #{tpu_custom_call.1} parent=11 // pred_region
          %200 = vsyncadd [#allocation11], 0
          %s201 = sshll.u32 %s3, 4
          %s202 = int_to_ptr.hbm [resolvable:$true] %s201
          %s203 = sshll.u32 [#allocation10], 4
          %s204 = int_to_ptr.vmem [resolvable:$true] %s203
          %209 = dma.hbm_to_vmem [thread:$0]  %s202, 1024, %s204, [#allocation11], 128, 128, 8
        $region24: #{tpu_custom_call.1} parent=11 // pred_fallthru
          _
        // Predicated region
        $region25: #{tpu_custom_call.1} parent=11 // pred_check
          %p210 = pneg %p129
        $region26: #{tpu_custom_call.1} parent=11 // pred_check_branch
          %212 = sbr.rel (%p210) target = $region28
        $region27: #{tpu_custom_call.1} parent=11 // pred_region
          _
        $region28: #{tpu_custom_call.1} parent=11 // pred_fallthru
          _
      $region12: #{tpu_custom_call.1} parent=5 // pred_fallthru
        _
      %p213 = scmp.lt.s32.totalorder %s19, 2
      // Predicated region
      $region29: #{tpu_custom_call.1} parent=5 // pred_check
        %p214 = pneg %p213
      $region30: #{tpu_custom_call.1} parent=5 // pred_check_branch
        %216 = sbr.rel (%p214) target = $region32
      $region31: #{tpu_custom_call.1} parent=5 // pred_region
        // Predicated region
        $region33: #{tpu_custom_call.1} parent=31 // pred_check
          %p217 = pneg %p39
        $region34: #{tpu_custom_call.1} parent=31 // pred_check_branch
          %219 = sbr.rel (%p217) target = $region36
        $region35: #{tpu_custom_call.1} parent=31 // pred_region
          %s220 = sand.u32 %s29, 1
          %s221 = scalar_lea.sflag [#allocation5], %s220
          %s222 = sand.u32 %s29, 1
          %s223 = smul.addr %s222, 16
          %s224 = scalar_lea.vmem [#allocation4], %s223
          %s225 = smul.u32 2, %s19
          %227 = vsyncadd %s221, 0
          %s228 = smul.addr %s225, 8
          %s229 = scalar_lea.hbm %s0, %s228
          %s230 = sshll.u32 %s229, 4
          %s231 = int_to_ptr.hbm [resolvable:$true] %s230
          %s232 = sshll.u32 %s224, 4
          %s233 = int_to_ptr.vmem [resolvable:$true] %s232
          %238 = dma.hbm_to_vmem [thread:$0]  %s231, 256, %s233, %s221, 128, 128, 8
        $region36: #{tpu_custom_call.1} parent=31 // pred_fallthru
          _
      $region32: #{tpu_custom_call.1} parent=5 // pred_fallthru
        _
      %p239 = scmp.le.s32.totalorder 1, %s19
      %p240 = scmp.lt.s32.totalorder %s19, 3
      %p241 = pnand %p239, %p240
      %p242 = pneg %p241
      // Predicated region
      $region37: #{tpu_custom_call.1} parent=5 // pred_check
        _
      $region38: #{tpu_custom_call.1} parent=5 // pred_check_branch
        %244 = sbr.rel (%p241) target = $region40
      $region39: #{tpu_custom_call.1} parent=5 // pred_region
        %s245 = ssub.s32 %s19, 1
        %s246 = sand.u32 %s32, 1
        %s247 = scalar_lea.sflag [#allocation5], %s246
        %s248 = sand.u32 %s32, 1
        %s249 = smul.addr %s248, 16
        %s250 = scalar_lea.vmem [#allocation4], %s249
        // Predicated region
        $region41: #{tpu_custom_call.1} parent=39 // pred_check
          %p251 = pneg %p45
        $region42: #{tpu_custom_call.1} parent=39 // pred_check_branch
          %253 = sbr.rel (%p251) target = $region44
        $region43: #{tpu_custom_call.1} parent=39 // pred_region
          %255 = dma.done %s247, 256
        $region44: #{tpu_custom_call.1} parent=39 // pred_fallthru
          _
        // Predicated region
        $region45: #{tpu_custom_call.1} parent=39 // pred_check
          %p256 = pneg %p66
        $region46: #{tpu_custom_call.1} parent=39 // pred_check_branch
          %258 = sbr.rel (%p256) target = $region48
        $region47: #{tpu_custom_call.1} parent=39 // pred_region
          %260 = dma.done [#allocation8], 2048
        $region48: #{tpu_custom_call.1} parent=39 // pred_fallthru
          _
        // Predicated region
        $region49: #{tpu_custom_call.1} parent=39 // pred_check
          %p261 = pneg %p87
        $region50: #{tpu_custom_call.1} parent=39 // pred_check_branch
          %263 = sbr.rel (%p261) target = $region52
        $region51: #{tpu_custom_call.1} parent=39 // pred_region
          %265 = dma.done [#allocation8], 32
        $region52: #{tpu_custom_call.1} parent=39 // pred_fallthru
          _
        // Predicated region
        $region53: #{tpu_custom_call.1} parent=39 // pred_check
          %p266 = pneg %p108
        $region54: #{tpu_custom_call.1} parent=39 // pred_check_branch
          %268 = sbr.rel (%p266) target = $region56
        $region55: #{tpu_custom_call.1} parent=39 // pred_region
          %270 = dma.done [#allocation11], 1024
        $region56: #{tpu_custom_call.1} parent=39 // pred_fallthru
          _
        %s271 = sand.u32 %s32, 1
        %s272 = scalar_lea.sflag [#allocation5], %s271
        %s273 = sand.u32 %s32, 1
        %s274 = smul.addr %s273, 16
        %s275 = scalar_lea.vmem [#allocation4], %s274
        %p276 = pneg %p45
        %p277 = pneg %p42
        %p278 = pneg %p66
        %p279 = pneg %p63
        %p280 = pneg %p87
        %p281 = pneg %p84
        %p282 = pneg %p108
        %p283 = pneg %p105
        %p284 = pneg %p129
        %p285 = pneg %p126
        %p286 = pneg %p155
        %p287 = pneg %p152
        %s288 = sand.u32 %s142, 1
        %s289 = scalar_lea.sflag [#allocation6], %s288
        %s290 = sand.u32 %s142, 1
        %s291 = smul.addr %s290, 16
        %s292 = scalar_lea.vmem [#allocation12], %s291
        %s293 = smul.u32 2, %s24
        %s294 = smul.u32 2, %s24
        %v295 = vld [vmem:[%s250] sm:$0xff]
        %v296 = vld [vmem:[%s250 + $0x8] sm:$0xff]
        %v297 = vld [vmem:[#allocation7] sm:$0xff]
        %v298 = vld [vmem:[#allocation7 + $0x8] sm:$0xff]
        %v299 = vld [vmem:[#allocation7 + $0x10] sm:$0xff]
        %v300 = vld [vmem:[#allocation7 + $0x18] sm:$0xff]
        %v301 = vld [vmem:[#allocation7 + $0x20] sm:$0xff]
        %v302 = vld [vmem:[#allocation7 + $0x28] sm:$0xff]
        %v303 = vld [vmem:[#allocation7 + $0x30] sm:$0xff]
        %v304 = vld [vmem:[#allocation7 + $0x38] sm:$0xff]
        %v305 = vld [vmem:[#allocation7 + $0x40] sm:$0xff]
        %v306 = vld [vmem:[#allocation7 + $0x48] sm:$0xff]
        %v307 = vld [vmem:[#allocation7 + $0x50] sm:$0xff]
        %v308 = vld [vmem:[#allocation7 + $0x58] sm:$0xff]
        %v309 = vld [vmem:[#allocation7 + $0x60] sm:$0xff]
        %v310 = vld [vmem:[#allocation7 + $0x68] sm:$0xff]
        %v311 = vld [vmem:[#allocation7 + $0x70] sm:$0xff]
        %v312 = vld [vmem:[#allocation7 + $0x78] sm:$0xff]
        %v313 = vld [vmem:[#allocation9] sm:$0x3]
        %v315 = vperm.slane %v313, 0
        %v316 = vperm.slane %v313, 1
        %vm319 = vcmask 523264
        %v321 = vsel %vm319, %v295, 0
        %v324 = vsel %vm319, %v296, 0
        %326 = vmatpush.msra.mxu0 0.0
        %327 = vmatpush.msra.mxu0 0.0
        %328 = vmatpush.msra.mxu0 0.0
        %329 = vmatpush.msra.mxu0 0.0
        %330 = vmatpush.msra.mxu0 0.0
        %331 = vmatpush.msra.mxu0 0.0
        %332 = vmatpush.msra.mxu0 0.0
        %333 = vmatpush.msra.mxu0 0.0
        %334 = vmatpush.msra.mxu0 %v311
        %335 = vmatpush.msra.mxu0 %v309
        %336 = vmatpush.msra.mxu0 %v307
        %337 = vmatpush.msra.mxu0 %v305
        %338 = vmatpush.msra.mxu0 %v303
        %339 = vmatpush.msra.mxu0 %v301
        %340 = vmatpush.msra.mxu0 %v299
        %341 = vmatpush.msra.mxu0 %v297
        %342 = vmatmul.f32.gmra.mxu0 %v321
        %v343 = vpop.f32.mrf.mxu0
        %v344 = vadd.f32 %v315, %v343
        %345 = vmatmul.f32.gmra.mxu0 %v324
        %v346 = vpop.f32.mrf.mxu0
        %v347 = vadd.f32 %v315, %v346
        %348 = vdwg.mxu0
        %349 = vmatpush.msra.mxu0 0.0
        %350 = vmatpush.msra.mxu0 0.0
        %351 = vmatpush.msra.mxu0 0.0
        %352 = vmatpush.msra.mxu0 0.0
        %353 = vmatpush.msra.mxu0 0.0
        %354 = vmatpush.msra.mxu0 0.0
        %355 = vmatpush.msra.mxu0 0.0
        %356 = vmatpush.msra.mxu0 0.0
        %357 = vmatpush.msra.mxu0 %v312
        %358 = vmatpush.msra.mxu0 %v310
        %359 = vmatpush.msra.mxu0 %v308
        %360 = vmatpush.msra.mxu0 %v306
        %361 = vmatpush.msra.mxu0 %v304
        %362 = vmatpush.msra.mxu0 %v302
        %363 = vmatpush.msra.mxu0 %v300
        %364 = vmatpush.msra.mxu0 %v298
        %365 = vmatmul.f32.gmra.mxu0 %v321
        %v366 = vpop.f32.mrf.mxu0
        %v367 = vadd.f32 %v316, %v366
        %368 = vmatmul.f32.gmra.mxu0 %v324
        %v369 = vpop.f32.mrf.mxu0
        %v370 = vadd.f32 %v316, %v369
        %371 = vdwg.mxu0
        %372 = vst [vmem:[#allocation2] sm:$0xff] %v344
        %373 = vst.msk [vmem:[#allocation2 + $0x8] sm:$0xff] %vm319, %v367
        %374 = vst [vmem:[#allocation2 + $0x10] sm:$0xff] %v347
        %375 = vst.msk [vmem:[#allocation2 + $0x18] sm:$0xff] %vm319, %v370
        %v376 = vld [vmem:[#allocation2] sm:$0xff]
        %v377 = vld [vmem:[#allocation2 + $0x10] sm:$0xff]
        %v378 = vmul.f32 %v376, 0.25
        %v379 = vmul.f32 %v377, 0.25
        %v380 = vld [vmem:[#allocation2 + $0x8] sm:$0xff]
        %v381 = vld [vmem:[#allocation2 + $0x18] sm:$0xff]
        %384 = vrot.lane.b32.xlu0 %v376, 64
        %v385 = vpop.permute.xlu0 %384
        %386 = vrot.lane.b32.xlu0 %v377, 64
        %v387 = vpop.permute.xlu0 %386
        %vm388 = vcmask 130048
        %v390 = vsel %vm388, %v378, 0
        %v393 = vsel %vm388, %v379, 0
        %v395 = vsel %vm388, %v385, 0
        %v397 = vsel %vm388, %v387, 0
        %399 = vmatpush.xpose.msra.mxu0 0.0
        %400 = vmatpush.xpose.msra.mxu0 0.0
        %401 = vmatpush.xpose.msra.mxu0 0.0
        %402 = vmatpush.xpose.msra.mxu0 0.0
        %403 = vmatpush.xpose.msra.mxu0 0.0
        %404 = vmatpush.xpose.msra.mxu0 0.0
        %405 = vmatpush.xpose.msra.mxu0 0.0
        %406 = vmatpush.xpose.msra.mxu0 0.0
        %407 = vmatpush.xpose.msra.mxu0 0.0
        %408 = vmatpush.xpose.msra.mxu0 0.0
        %409 = vmatpush.xpose.msra.mxu0 0.0
        %410 = vmatpush.xpose.msra.mxu0 0.0
        %411 = vmatpush.xpose.msra.mxu0 0.0
        %412 = vmatpush.xpose.msra.mxu0 0.0
        %413 = vmatpush.xpose.msra.mxu0 %v397
        %414 = vmatpush.xpose.msra.mxu0 %v395
        %415 = vmatmul.f32.gmra.mxu0 %v390
        %v416 = vpop.f32.mrf.mxu0
        %v417 = vadd.f32 0.0, %v416
        %418 = vmatmul.f32.gmra.mxu0 %v393
        %v419 = vpop.f32.mrf.mxu0
        %v420 = vadd.f32 0.0, %v419
        %421 = vdwg.mxu0
        %v422 = vsel %vm388, %v417, -inf
        %423 = vmax.xlane.f32.xlu0 %v422
        %v424 = vpop.xlane.xlu0 %423
        %v425 = vsel %vm388, %v420, -inf
        %426 = vmax.xlane.f32.xlu0 %v425
        %v427 = vpop.xlane.xlu0 %426
        %v428 = vsub.f32 %v417, %v424
        %v429 = vsub.f32 %v420, %v427
        %v430 = vmul.f32 %v428, 1.442695
        %v431 = vpow.pop %v430
        %v432 = vmul.f32 %v429, 1.442695
        %v433 = vpow.pop %v432
        %v434 = vsel %vm388, %v431, 0.0
        %435 = vadd.xlane.f32.xlu0 %v434
        %v436 = vpop.xlane.xlu0 %435
        %v437 = vsel %vm388, %v433, 0.0
        %438 = vadd.xlane.f32.xlu0 %v437
        %v439 = vpop.xlane.xlu0 %438
        %v441 = vsel %vm388, %v431, 0
        %v444 = vsel %vm388, %v433, 0
        %446 = vmatpush.msra.mxu0 0.0
        %447 = vmatpush.msra.mxu0 0.0
        %448 = vmatpush.msra.mxu0 0.0
        %449 = vmatpush.msra.mxu0 0.0
        %450 = vmatpush.msra.mxu0 0.0
        %451 = vmatpush.msra.mxu0 0.0
        %452 = vmatpush.msra.mxu0 0.0
        %453 = vmatpush.msra.mxu0 0.0
        %454 = vmatpush.msra.mxu0 0.0
        %455 = vmatpush.msra.mxu0 0.0
        %456 = vmatpush.msra.mxu0 0.0
        %457 = vmatpush.msra.mxu0 0.0
        %458 = vmatpush.msra.mxu0 0.0
        %459 = vmatpush.msra.mxu0 0.0
        %460 = vmatpush.msra.mxu0 %v381
        %461 = vmatpush.msra.mxu0 %v380
        %462 = vmatmul.f32.gmra.mxu0 %v441
        %v463 = vpop.f32.mrf.mxu0
        %v464 = vadd.f32 0.0, %v463
        %465 = vmatmul.f32.gmra.mxu0 %v444
        %v466 = vpop.f32.mrf.mxu0
        %v467 = vadd.f32 0.0, %v466
        %468 = vdwg.mxu0
        %v469 = vrcp.pop %v436
        %v470 = vmul.f32 %v436, %v469
        %v471 = vsub.f32 1.0, %v470
        %v472 = vmul.f32 %v469, %v471
        %v473 = vadd.f32 %v469, %v472
        %vm474 = vweird.f32 %v436
        %vm475 = vweird.f32 %v469
        %vm476 = vmor %vm474, %vm475
        %v477 = vsel %vm476, %v469, %v473
        %v478 = vand.u32 2147483647, %v436
        %vm479 = vcmp.eq.f32.partialorder %v478, 8.507059e+37
        %v480 = vand.u32 %v436, 2147483648
        %v481 = vor.u32 1.1754944e-38, %v480
        %v482 = vsel %vm479, %v481, %v477
        %v483 = vrcp.pop %v439
        %v484 = vmul.f32 %v439, %v483
        %v485 = vsub.f32 1.0, %v484
        %v486 = vmul.f32 %v483, %v485
        %v487 = vadd.f32 %v483, %v486
        %vm488 = vweird.f32 %v439
        %vm489 = vweird.f32 %v483
        %vm490 = vmor %vm488, %vm489
        %v491 = vsel %vm490, %v483, %v487
        %v492 = vand.u32 2147483647, %v439
        %vm493 = vcmp.eq.f32.partialorder %v492, 8.507059e+37
        %v494 = vand.u32 %v439, 2147483648
        %v495 = vor.u32 1.1754944e-38, %v494
        %v496 = vsel %vm493, %v495, %v491
        %v497 = vmul.f32 %v464, %v482
        %v498 = vmul.f32 %v467, %v496
        %499 = vst.msk [vmem:[#allocation3] sm:$0xff] %vm388, %v497
        %500 = vst.msk [vmem:[#allocation3 + $0x8] sm:$0xff] %vm388, %v498
        %v501 = vld [vmem:[#allocation2] sm:$0xff]
        %v502 = vld [vmem:[#allocation2 + $0x10] sm:$0xff]
        %v503 = vmul.f32 %v501, 0.25
        %v504 = vmul.f32 %v502, 0.25
        %v505 = vld [vmem:[#allocation2 + $0x8] sm:$0xff]
        %v506 = vld [vmem:[#allocation2 + $0x18] sm:$0xff]
        %509 = vrot.lane.b32.xlu0 %v503, 112
        %v510 = vpop.permute.xlu0 %509
        %511 = vrot.lane.b32.xlu0 %v504, 112
        %v512 = vpop.permute.xlu0 %511
        %515 = vrot.lane.b32.xlu0 %v501, 48
        %v516 = vpop.permute.xlu0 %515
        %517 = vrot.lane.b32.xlu0 %v502, 48
        %v518 = vpop.permute.xlu0 %517
        %v519 = vsel %vm388, %v510, 0
        %v521 = vsel %vm388, %v512, 0
        %v523 = vsel %vm388, %v516, 0
        %v525 = vsel %vm388, %v518, 0
        %527 = vmatpush.xpose.msra.mxu0 0.0
        %528 = vmatpush.xpose.msra.mxu0 0.0
        %529 = vmatpush.xpose.msra.mxu0 0.0
        %530 = vmatpush.xpose.msra.mxu0 0.0
        %531 = vmatpush.xpose.msra.mxu0 0.0
        %532 = vmatpush.xpose.msra.mxu0 0.0
        %533 = vmatpush.xpose.msra.mxu0 0.0
        %534 = vmatpush.xpose.msra.mxu0 0.0
        %535 = vmatpush.xpose.msra.mxu0 0.0
        %536 = vmatpush.xpose.msra.mxu0 0.0
        %537 = vmatpush.xpose.msra.mxu0 0.0
        %538 = vmatpush.xpose.msra.mxu0 0.0
        %539 = vmatpush.xpose.msra.mxu0 0.0
        %540 = vmatpush.xpose.msra.mxu0 0.0
        %541 = vmatpush.xpose.msra.mxu0 %v525
        %542 = vmatpush.xpose.msra.mxu0 %v523
        %543 = vmatmul.f32.gmra.mxu0 %v519
        %v544 = vpop.f32.mrf.mxu0
        %v545 = vadd.f32 0.0, %v544
        %546 = vmatmul.f32.gmra.mxu0 %v521
        %v547 = vpop.f32.mrf.mxu0
        %v548 = vadd.f32 0.0, %v547
        %549 = vdwg.mxu0
        %v550 = vsel %vm388, %v545, -inf
        %551 = vmax.xlane.f32.xlu0 %v550
        %v552 = vpop.xlane.xlu0 %551
        %v553 = vsel %vm388, %v548, -inf
        %554 = vmax.xlane.f32.xlu0 %v553
        %v555 = vpop.xlane.xlu0 %554
        %v556 = vsub.f32 %v545, %v552
        %v557 = vsub.f32 %v548, %v555
        %v558 = vmul.f32 %v556, 1.442695
        %v559 = vpow.pop %v558
        %v560 = vmul.f32 %v557, 1.442695
        %v561 = vpow.pop %v560
        %v562 = vsel %vm388, %v559, 0.0
        %563 = vadd.xlane.f32.xlu0 %v562
        %v564 = vpop.xlane.xlu0 %563
        %v565 = vsel %vm388, %v561, 0.0
        %566 = vadd.xlane.f32.xlu0 %v565
        %v567 = vpop.xlane.xlu0 %566
        %570 = vrot.lane.b32.xlu0 %v505, 112
        %v571 = vpop.permute.xlu0 %570
        %572 = vrot.lane.b32.xlu0 %v506, 112
        %v573 = vpop.permute.xlu0 %572
        %v577 = vsel %vm388, %v559, 0
        %v580 = vsel %vm388, %v561, 0
        %582 = vmatpush.msra.mxu0 0.0
        %583 = vmatpush.msra.mxu0 0.0
        %584 = vmatpush.msra.mxu0 0.0
        %585 = vmatpush.msra.mxu0 0.0
        %586 = vmatpush.msra.mxu0 0.0
        %587 = vmatpush.msra.mxu0 0.0
        %588 = vmatpush.msra.mxu0 0.0
        %589 = vmatpush.msra.mxu0 0.0
        %590 = vmatpush.msra.mxu0 0.0
        %591 = vmatpush.msra.mxu0 0.0
        %592 = vmatpush.msra.mxu0 0.0
        %593 = vmatpush.msra.mxu0 0.0
        %594 = vmatpush.msra.mxu0 0.0
        %595 = vmatpush.msra.mxu0 0.0
        %596 = vmatpush.msra.mxu0 %v573
        %597 = vmatpush.msra.mxu0 %v571
        %598 = vmatmul.f32.gmra.mxu0 %v577
        %v599 = vpop.f32.mrf.mxu0
        %v600 = vadd.f32 0.0, %v599
        %601 = vmatmul.f32.gmra.mxu0 %v580
        %v602 = vpop.f32.mrf.mxu0
        %v603 = vadd.f32 0.0, %v602
        %604 = vdwg.mxu0
        %v605 = vrcp.pop %v564
        %v606 = vmul.f32 %v564, %v605
        %v607 = vsub.f32 1.0, %v606
        %v608 = vmul.f32 %v605, %v607
        %v609 = vadd.f32 %v605, %v608
        %vm610 = vweird.f32 %v564
        %vm611 = vweird.f32 %v605
        %vm612 = vmor %vm610, %vm611
        %v613 = vsel %vm612, %v605, %v609
        %v614 = vand.u32 2147483647, %v564
        %vm615 = vcmp.eq.f32.partialorder %v614, 8.507059e+37
        %v616 = vand.u32 %v564, 2147483648
        %v617 = vor.u32 1.1754944e-38, %v616
        %v618 = vsel %vm615, %v617, %v613
        %v619 = vrcp.pop %v567
        %v620 = vmul.f32 %v567, %v619
        %v621 = vsub.f32 1.0, %v620
        %v622 = vmul.f32 %v619, %v621
        %v623 = vadd.f32 %v619, %v622
        %vm624 = vweird.f32 %v567
        %vm625 = vweird.f32 %v619
        %vm626 = vmor %vm624, %vm625
        %v627 = vsel %vm626, %v619, %v623
        %v628 = vand.u32 2147483647, %v567
        %vm629 = vcmp.eq.f32.partialorder %v628, 8.507059e+37
        %v630 = vand.u32 %v567, 2147483648
        %v631 = vor.u32 1.1754944e-38, %v630
        %v632 = vsel %vm629, %v631, %v627
        %v633 = vmul.f32 %v600, %v618
        %v634 = vmul.f32 %v603, %v632
        %637 = vrot.lane.b32.xlu0 %v633, 16
        %v638 = vpop.permute.xlu0 %637
        %639 = vrot.lane.b32.xlu0 %v634, 16
        %v640 = vpop.permute.xlu0 %639
        %vm643 = vcmask 261248
        %644 = vst.msk [vmem:[#allocation3] sm:$0xff] %vm643, %v638
        %645 = vst.msk [vmem:[#allocation3 + $0x8] sm:$0xff] %vm643, %v640
        %v646 = vld [vmem:[#allocation2] sm:$0xff]
        %v647 = vld [vmem:[#allocation2 + $0x10] sm:$0xff]
        %v648 = vmul.f32 %v646, 0.25
        %v649 = vmul.f32 %v647, 0.25
        %v650 = vld [vmem:[#allocation2 + $0x8] sm:$0xff]
        %v651 = vld [vmem:[#allocation2 + $0x18] sm:$0xff]
        %654 = vrot.lane.b32.xlu0 %v648, 96
        %v655 = vpop.permute.xlu0 %654
        %656 = vrot.lane.b32.xlu0 %v649, 96
        %v657 = vpop.permute.xlu0 %656
        %660 = vrot.lane.b32.xlu0 %v646, 32
        %v661 = vpop.permute.xlu0 %660
        %662 = vrot.lane.b32.xlu0 %v647, 32
        %v663 = vpop.permute.xlu0 %662
        %v664 = vsel %vm388, %v655, 0
        %v666 = vsel %vm388, %v657, 0
        %v668 = vsel %vm388, %v661, 0
        %v670 = vsel %vm388, %v663, 0
        %672 = vmatpush.xpose.msra.mxu0 0.0
        %673 = vmatpush.xpose.msra.mxu0 0.0
        %674 = vmatpush.xpose.msra.mxu0 0.0
        %675 = vmatpush.xpose.msra.mxu0 0.0
        %676 = vmatpush.xpose.msra.mxu0 0.0
        %677 = vmatpush.xpose.msra.mxu0 0.0
        %678 = vmatpush.xpose.msra.mxu0 0.0
        %679 = vmatpush.xpose.msra.mxu0 0.0
        %680 = vmatpush.xpose.msra.mxu0 0.0
        %681 = vmatpush.xpose.msra.mxu0 0.0
        %682 = vmatpush.xpose.msra.mxu0 0.0
        %683 = vmatpush.xpose.msra.mxu0 0.0
        %684 = vmatpush.xpose.msra.mxu0 0.0
        %685 = vmatpush.xpose.msra.mxu0 0.0
        %686 = vmatpush.xpose.msra.mxu0 %v670
        %687 = vmatpush.xpose.msra.mxu0 %v668
        %688 = vmatmul.f32.gmra.mxu0 %v664
        %v689 = vpop.f32.mrf.mxu0
        %v690 = vadd.f32 0.0, %v689
        %691 = vmatmul.f32.gmra.mxu0 %v666
        %v692 = vpop.f32.mrf.mxu0
        %v693 = vadd.f32 0.0, %v692
        %694 = vdwg.mxu0
        %v695 = vsel %vm388, %v690, -inf
        %696 = vmax.xlane.f32.xlu0 %v695
        %v697 = vpop.xlane.xlu0 %696
        %v698 = vsel %vm388, %v693, -inf
        %699 = vmax.xlane.f32.xlu0 %v698
        %v700 = vpop.xlane.xlu0 %699
        %v701 = vsub.f32 %v690, %v697
        %v702 = vsub.f32 %v693, %v700
        %v703 = vmul.f32 %v701, 1.442695
        %v704 = vpow.pop %v703
        %v705 = vmul.f32 %v702, 1.442695
        %v706 = vpow.pop %v705
        %v707 = vsel %vm388, %v704, 0.0
        %708 = vadd.xlane.f32.xlu0 %v707
        %v709 = vpop.xlane.xlu0 %708
        %v710 = vsel %vm388, %v706, 0.0
        %711 = vadd.xlane.f32.xlu0 %v710
        %v712 = vpop.xlane.xlu0 %711
        %715 = vrot.lane.b32.xlu0 %v650, 96
        %v716 = vpop.permute.xlu0 %715
        %717 = vrot.lane.b32.xlu0 %v651, 96
        %v718 = vpop.permute.xlu0 %717
        %v722 = vsel %vm388, %v704, 0
        %v725 = vsel %vm388, %v706, 0
        %727 = vmatpush.msra.mxu0 0.0
        %728 = vmatpush.msra.mxu0 0.0
        %729 = vmatpush.msra.mxu0 0.0
        %730 = vmatpush.msra.mxu0 0.0
        %731 = vmatpush.msra.mxu0 0.0
        %732 = vmatpush.msra.mxu0 0.0
        %733 = vmatpush.msra.mxu0 0.0
        %734 = vmatpush.msra.mxu0 0.0
        %735 = vmatpush.msra.mxu0 0.0
        %736 = vmatpush.msra.mxu0 0.0
        %737 = vmatpush.msra.mxu0 0.0
        %738 = vmatpush.msra.mxu0 0.0
        %739 = vmatpush.msra.mxu0 0.0
        %740 = vmatpush.msra.mxu0 0.0
        %741 = vmatpush.msra.mxu0 %v718
        %742 = vmatpush.msra.mxu0 %v716
        %743 = vmatmul.f32.gmra.mxu0 %v722
        %v744 = vpop.f32.mrf.mxu0
        %v745 = vadd.f32 0.0, %v744
        %746 = vmatmul.f32.gmra.mxu0 %v725
        %v747 = vpop.f32.mrf.mxu0
        %v748 = vadd.f32 0.0, %v747
        %749 = vdwg.mxu0
        %v750 = vrcp.pop %v709
        %v751 = vmul.f32 %v709, %v750
        %v752 = vsub.f32 1.0, %v751
        %v753 = vmul.f32 %v750, %v752
        %v754 = vadd.f32 %v750, %v753
        %vm755 = vweird.f32 %v709
        %vm756 = vweird.f32 %v750
        %vm757 = vmor %vm755, %vm756
        %v758 = vsel %vm757, %v750, %v754
        %v759 = vand.u32 2147483647, %v709
        %vm760 = vcmp.eq.f32.partialorder %v759, 8.507059e+37
        %v761 = vand.u32 %v709, 2147483648
        %v762 = vor.u32 1.1754944e-38, %v761
        %v763 = vsel %vm760, %v762, %v758
        %v764 = vrcp.pop %v712
        %v765 = vmul.f32 %v712, %v764
        %v766 = vsub.f32 1.0, %v765
        %v767 = vmul.f32 %v764, %v766
        %v768 = vadd.f32 %v764, %v767
        %vm769 = vweird.f32 %v712
        %vm770 = vweird.f32 %v764
        %vm771 = vmor %vm769, %vm770
        %v772 = vsel %vm771, %v764, %v768
        %v773 = vand.u32 2147483647, %v712
        %vm774 = vcmp.eq.f32.partialorder %v773, 8.507059e+37
        %v775 = vand.u32 %v712, 2147483648
        %v776 = vor.u32 1.1754944e-38, %v775
        %v777 = vsel %vm774, %v776, %v772
        %v778 = vmul.f32 %v745, %v763
        %v779 = vmul.f32 %v748, %v777
        %782 = vrot.lane.b32.xlu0 %v778, 32
        %v783 = vpop.permute.xlu0 %782
        %784 = vrot.lane.b32.xlu0 %v779, 32
        %v785 = vpop.permute.xlu0 %784
        %vm788 = vcmask 392448
        %789 = vst.msk [vmem:[#allocation3] sm:$0xff] %vm788, %v783
        %790 = vst.msk [vmem:[#allocation3 + $0x8] sm:$0xff] %vm788, %v785
        %v791 = vld [vmem:[#allocation2] sm:$0xff]
        %v792 = vld [vmem:[#allocation2 + $0x10] sm:$0xff]
        %v793 = vmul.f32 %v791, 0.25
        %v794 = vmul.f32 %v792, 0.25
        %v795 = vld [vmem:[#allocation2 + $0x8] sm:$0xff]
        %v796 = vld [vmem:[#allocation2 + $0x18] sm:$0xff]
        %799 = vrot.lane.b32.xlu0 %v793, 80
        %v800 = vpop.permute.xlu0 %799
        %801 = vrot.lane.b32.xlu0 %v794, 80
        %v802 = vpop.permute.xlu0 %801
        %805 = vrot.lane.b32.xlu0 %v791, 16
        %v806 = vpop.permute.xlu0 %805
        %807 = vrot.lane.b32.xlu0 %v792, 16
        %v808 = vpop.permute.xlu0 %807
        %v809 = vsel %vm388, %v800, 0
        %v811 = vsel %vm388, %v802, 0
        %v813 = vsel %vm388, %v806, 0
        %v815 = vsel %vm388, %v808, 0
        %817 = vmatpush.xpose.msra.mxu0 0.0
        %818 = vmatpush.xpose.msra.mxu0 0.0
        %819 = vmatpush.xpose.msra.mxu0 0.0
        %820 = vmatpush.xpose.msra.mxu0 0.0
        %821 = vmatpush.xpose.msra.mxu0 0.0
        %822 = vmatpush.xpose.msra.mxu0 0.0
        %823 = vmatpush.xpose.msra.mxu0 0.0
        %824 = vmatpush.xpose.msra.mxu0 0.0
        %825 = vmatpush.xpose.msra.mxu0 0.0
        %826 = vmatpush.xpose.msra.mxu0 0.0
        %827 = vmatpush.xpose.msra.mxu0 0.0
        %828 = vmatpush.xpose.msra.mxu0 0.0
        %829 = vmatpush.xpose.msra.mxu0 0.0
        %830 = vmatpush.xpose.msra.mxu0 0.0
        %831 = vmatpush.xpose.msra.mxu0 %v815
        %832 = vmatpush.xpose.msra.mxu0 %v813
        %833 = vmatmul.f32.gmra.mxu0 %v809
        %v834 = vpop.f32.mrf.mxu0
        %v835 = vadd.f32 0.0, %v834
        %836 = vmatmul.f32.gmra.mxu0 %v811
        %v837 = vpop.f32.mrf.mxu0
        %v838 = vadd.f32 0.0, %v837
        %839 = vdwg.mxu0
        %v840 = vsel %vm388, %v835, -inf
        %841 = vmax.xlane.f32.xlu0 %v840
        %v842 = vpop.xlane.xlu0 %841
        %v843 = vsel %vm388, %v838, -inf
        %844 = vmax.xlane.f32.xlu0 %v843
        %v845 = vpop.xlane.xlu0 %844
        %v846 = vsub.f32 %v835, %v842
        %v847 = vsub.f32 %v838, %v845
        %v848 = vmul.f32 %v846, 1.442695
        %v849 = vpow.pop %v848
        %v850 = vmul.f32 %v847, 1.442695
        %v851 = vpow.pop %v850
        %v852 = vsel %vm388, %v849, 0.0
        %853 = vadd.xlane.f32.xlu0 %v852
        %v854 = vpop.xlane.xlu0 %853
        %v855 = vsel %vm388, %v851, 0.0
        %856 = vadd.xlane.f32.xlu0 %v855
        %v857 = vpop.xlane.xlu0 %856
        %860 = vrot.lane.b32.xlu0 %v795, 80
        %v861 = vpop.permute.xlu0 %860
        %862 = vrot.lane.b32.xlu0 %v796, 80
        %v863 = vpop.permute.xlu0 %862
        %v867 = vsel %vm388, %v849, 0
        %v870 = vsel %vm388, %v851, 0
        %872 = vmatpush.msra.mxu0 0.0
        %873 = vmatpush.msra.mxu0 0.0
        %874 = vmatpush.msra.mxu0 0.0
        %875 = vmatpush.msra.mxu0 0.0
        %876 = vmatpush.msra.mxu0 0.0
        %877 = vmatpush.msra.mxu0 0.0
        %878 = vmatpush.msra.mxu0 0.0
        %879 = vmatpush.msra.mxu0 0.0
        %880 = vmatpush.msra.mxu0 0.0
        %881 = vmatpush.msra.mxu0 0.0
        %882 = vmatpush.msra.mxu0 0.0
        %883 = vmatpush.msra.mxu0 0.0
        %884 = vmatpush.msra.mxu0 0.0
        %885 = vmatpush.msra.mxu0 0.0
        %886 = vmatpush.msra.mxu0 %v863
        %887 = vmatpush.msra.mxu0 %v861
        %888 = vmatmul.f32.gmra.mxu0 %v867
        %v889 = vpop.f32.mrf.mxu0
        %v890 = vadd.f32 0.0, %v889
        %891 = vmatmul.f32.gmra.mxu0 %v870
        %v892 = vpop.f32.mrf.mxu0
        %v893 = vadd.f32 0.0, %v892
        %894 = vdwg.mxu0
        %v895 = vrcp.pop %v854
        %v896 = vmul.f32 %v854, %v895
        %v897 = vsub.f32 1.0, %v896
        %v898 = vmul.f32 %v895, %v897
        %v899 = vadd.f32 %v895, %v898
        %vm900 = vweird.f32 %v854
        %vm901 = vweird.f32 %v895
        %vm902 = vmor %vm900, %vm901
        %v903 = vsel %vm902, %v895, %v899
        %v904 = vand.u32 2147483647, %v854
        %vm905 = vcmp.eq.f32.partialorder %v904, 8.507059e+37
        %v906 = vand.u32 %v854, 2147483648
        %v907 = vor.u32 1.1754944e-38, %v906
        %v908 = vsel %vm905, %v907, %v903
        %v909 = vrcp.pop %v857
        %v910 = vmul.f32 %v857, %v909
        %v911 = vsub.f32 1.0, %v910
        %v912 = vmul.f32 %v909, %v911
        %v913 = vadd.f32 %v909, %v912
        %vm914 = vweird.f32 %v857
        %vm915 = vweird.f32 %v909
        %vm916 = vmor %vm914, %vm915
        %v917 = vsel %vm916, %v909, %v913
        %v918 = vand.u32 2147483647, %v857
        %vm919 = vcmp.eq.f32.partialorder %v918, 8.507059e+37
        %v920 = vand.u32 %v857, 2147483648
        %v921 = vor.u32 1.1754944e-38, %v920
        %v922 = vsel %vm919, %v921, %v917
        %v923 = vmul.f32 %v890, %v908
        %v924 = vmul.f32 %v893, %v922
        %927 = vrot.lane.b32.xlu0 %v923, 48
        %v928 = vpop.permute.xlu0 %927
        %929 = vrot.lane.b32.xlu0 %v924, 48
        %v930 = vpop.permute.xlu0 %929
        %vm933 = vcmask 523648
        %934 = vst.msk [vmem:[#allocation3] sm:$0xff] %vm933, %v928
        %935 = vst.msk [vmem:[#allocation3 + $0x8] sm:$0xff] %vm933, %v930
        %v936 = vld [vmem:[#allocation3] sm:$0xff]
        %v937 = vld [vmem:[#allocation3 + $0x8] sm:$0xff]
        %v938 = vld [vmem:[#allocation10] sm:$0xff]
        %v939 = vld [vmem:[#allocation10 + $0x8] sm:$0xff]
        %v940 = vld [vmem:[#allocation10 + $0x10] sm:$0xff]
        %v941 = vld [vmem:[#allocation10 + $0x18] sm:$0xff]
        %v942 = vld [vmem:[#allocation10 + $0x20] sm:$0xff]
        %v943 = vld [vmem:[#allocation10 + $0x28] sm:$0xff]
        %v944 = vld [vmem:[#allocation10 + $0x30] sm:$0xff]
        %v945 = vld [vmem:[#allocation10 + $0x38] sm:$0xff]
        %v946 = vld [vmem:[%s4] sm:$0x1]
        %v948 = vperm.slane %v946, 0
        %v951 = vsel %vm319, %v936, 0
        %v954 = vsel %vm319, %v937, 0
        %956 = vmatpush.msra.mxu0 0.0
        %957 = vmatpush.msra.mxu0 0.0
        %958 = vmatpush.msra.mxu0 0.0
        %959 = vmatpush.msra.mxu0 0.0
        %960 = vmatpush.msra.mxu0 0.0
        %961 = vmatpush.msra.mxu0 0.0
        %962 = vmatpush.msra.mxu0 0.0
        %963 = vmatpush.msra.mxu0 0.0
        %964 = vmatpush.msra.mxu0 %v945
        %965 = vmatpush.msra.mxu0 %v944
        %966 = vmatpush.msra.mxu0 %v943
        %967 = vmatpush.msra.mxu0 %v942
        %968 = vmatpush.msra.mxu0 %v941
        %969 = vmatpush.msra.mxu0 %v940
        %970 = vmatpush.msra.mxu0 %v939
        %971 = vmatpush.msra.mxu0 %v938
        %972 = vmatmul.f32.gmra.mxu0 %v951
        %v973 = vpop.f32.mrf.mxu0
        %v974 = vadd.f32 %v948, %v973
        %975 = vmatmul.f32.gmra.mxu0 %v954
        %v976 = vpop.f32.mrf.mxu0
        %v977 = vadd.f32 %v948, %v976
        %978 = vdwg.mxu0
        %979 = vst.msk [vmem:[%s292] sm:$0xff] %vm319, %v974
        %980 = vst.msk [vmem:[%s292 + $0x8] sm:$0xff] %vm319, %v977
        %s981 = sand.u32 %s142, 1
        %s982 = scalar_lea.sflag [#allocation6], %s981
        %s983 = sand.u32 %s142, 1
        %s984 = smul.addr %s983, 16
        %s985 = scalar_lea.vmem [#allocation12], %s984
        // Predicated region
        $region57: #{tpu_custom_call.1} parent=39 // pred_check
          %p986 = pneg %p152
        $region58: #{tpu_custom_call.1} parent=39 // pred_check_branch
          %988 = sbr.rel (%p986) target = $region60
        $region59: #{tpu_custom_call.1} parent=39 // pred_region
          %s989 = smul.u32 2, %s24
          %991 = vsyncadd %s982, 0
          %s992 = smul.addr %s989, 8
          %s993 = scalar_lea.hbm %s5, %s992
          %s994 = sshll.u32 %s985, 4
          %s995 = int_to_ptr.vmem [resolvable:$true] %s994
          %s996 = sshll.u32 %s993, 4
          %s997 = int_to_ptr.hbm [resolvable:$true] %s996
          %1002 = dma.vmem_to_hbm [thread:$0]  %s995, 256, %s997, %s982, 128, 128, 8
        $region60: #{tpu_custom_call.1} parent=39 // pred_fallthru
          _
      $region40: #{tpu_custom_call.1} parent=5 // pred_fallthru
        _
      %p1003 = scmp.le.s32.totalorder 2, %s19
      // Predicated region
      $region61: #{tpu_custom_call.1} parent=5 // pred_check
        %p1004 = pneg %p1003
      $region62: #{tpu_custom_call.1} parent=5 // pred_check_branch
        %1006 = sbr.rel (%p1004) target = $region64
      $region63: #{tpu_custom_call.1} parent=5 // pred_region
        %s1007 = ssub.s32 %s19, 2
        // Predicated region
        $region65: #{tpu_custom_call.1} parent=63 // pred_check
          %p1008 = pneg %p158
        $region66: #{tpu_custom_call.1} parent=63 // pred_check_branch
          %1010 = sbr.rel (%p1008) target = $region68
        $region67: #{tpu_custom_call.1} parent=63 // pred_region
          %s1011 = sand.u32 %s143, 1
          %s1012 = scalar_lea.sflag [#allocation6], %s1011
          %s1013 = sand.u32 %s143, 1
          %s1014 = smul.addr %s1013, 16
          %s1015 = scalar_lea.vmem [#allocation12], %s1014
          %1017 = dma.done %s1012, 256
        $region68: #{tpu_custom_call.1} parent=63 // pred_fallthru
          _
      $region64: #{tpu_custom_call.1} parent=5 // pred_fallthru
        _
    $region6: #{tpu_custom_call.1} parent=1 // loop_footer
      %s23 = sadd.s32 1, %s19
    $region7: #{tpu_custom_call.1} parent=1 // loop_footer_branch
      %18 = sbr.rel target = $region3
    $region8: #{tpu_custom_call.1} parent=1 // loop_exit
      _
    %1018 = vsyncpa [#allocation5], 1
    %s1019 = scalar_lea.sflag [#allocation5], 1
    %1020 = vsyncpa %s1019, 1
    %1021 = vsyncpa [#allocation8], 1
    %1022 = vsyncpa [#allocation11], 1
    %1023 = vsyncpa [#allocation6], 1
    %s1024 = scalar_lea.sflag [#allocation6], 1
    %1025 = vsyncpa %s1024, 1

</llo_original>
